<compile_context>
chip_gen: v6e
topology: v6e:2x2x1
jax: 0.10.0
libtpu: 0.0.40
codegen_flags: <defaults>
</compile_context>

<pallas_src>
import functools

import jax
import jax.numpy as jnp
from jax.experimental import pallas as pl
from jax.experimental.pallas import tpu as pltpu

DROPOUT_P = 0.5


def _round_up(x, m):
    return (x + m - 1) // m * m


def _linear_relu_dropout_kernel(seed_ref, x_ref, w_ref, b_ref, o_ref, acc_ref, *,
                                k_steps, n_cols, keep_threshold, scale,
                                apply_dropout, precision):
    # program_id must stay at the top level of the kernel (never inside a
    # pl.when body): the interpret-mode fallback cannot resolve it inside a
    # cond branch, and hoisting is free on hardware.
    i = pl.program_id(0)
    j = pl.program_id(1)
    k = pl.program_id(2)

    @pl.when(k == 0)
    def _init():
        acc_ref[...] = jnp.zeros_like(acc_ref)

    # Hot loop: pure MXU matmul (bf16 operands by default) + f32 accumulate.
    acc_ref[...] += jnp.dot(x_ref[...], w_ref[...],
                            preferred_element_type=jnp.float32,
                            precision=precision)

    @pl.when(k == k_steps - 1)
    def _finalize():
        tm, tn = acc_ref.shape

        # bias + ReLU on the f32 accumulator (VPU epilogue, off the hot K loop)
        y = jnp.maximum(acc_ref[...] + b_ref[...], 0.0)

        if not apply_dropout:
            # eval-mode / p == 0 fast path specialized at trace time
            o_ref[...] = y.astype(o_ref.dtype)
            return

        # Stateless dropout mask: lowbias32-style hash of the *global* output
        # element index mixed with the scalar seed, then an integer-threshold
        # compare.  The row term keeps the 32-bit multiply on a (tm, 1) column;
        # the lane iota is broadcast-added, so the (tm, tn) work is add/xor/shift.
        seed = seed_ref[0].astype(jnp.uint32)
        row = (jax.lax.broadcasted_iota(jnp.uint32, (tm, 1), 0)
               + (i * tm).astype(jnp.uint32))
        row_term = row * jnp.uint32(n_cols) + seed * jnp.uint32(0x9E3779B9)
        col = (jax.lax.broadcasted_iota(jnp.uint32, (1, tn), 1)
               + (j * tn).astype(jnp.uint32))
        h = row_term + col
        h = h ^ (h >> 16)
        h = h * jnp.uint32(0x7FEB352D)
        h = h ^ (h >> 15)
        h = h * jnp.uint32(0x846CA68B)
        h = h ^ (h >> 16)

        keep = h >= jnp.uint32(keep_threshold)          # P(keep) = 1 - p
        o_ref[...] = jnp.where(keep, y * scale, 0.0).astype(o_ref.dtype)


def activation_dropout_wrapper(x, w, b, seed, *, dropout_p=DROPOUT_P,
                               compute_dtype=jnp.bfloat16,
                               tm_max=512, tn_max=1024, tk_max=512):
    """dropout(relu(x @ w + b)); seed is an int32 array of shape (1,).

    Default tile caps keep the double-buffered working set well under v7x's
    64 MiB VMEM; on v5e/v6e (128 MiB) tn_max can be raised to ~2048 for fewer
    x re-reads on very wide layers.
    """
    B, IN = x.shape
    IN_w, OUT = w.shape
    assert IN == IN_w and b.shape == (OUT,)
    assert 0.0 <= dropout_p < 1.0, "dropout probability must be in [0, 1)"

    compute_dtype = jnp.dtype(compute_dtype)
    sub = 16 if compute_dtype.itemsize == 2 else 8   # bf16 packs two rows/sublane
    lane = 128

    tm = min(tm_max, _round_up(B, sub))
    tn = min(tn_max, _round_up(OUT, lane))
    tk = min(tk_max, _round_up(IN, lane))

    # Keep both v7x TensorCores busy: if the (M, N) parallel grid would be
    # (1, 1), split the N tile in two lane-aligned halves.
    if _round_up(B, tm) == tm and _round_up(OUT, tn) == tn and tn % 256 == 0:
        tn //= 2

    b_pad = _round_up(B, tm)
    out_pad = _round_up(OUT, tn)
    in_pad = _round_up(IN, tk)

    def cast_pad(a, rows, cols):
        if a.dtype != compute_dtype:
            a = a.astype(compute_dtype)          # cast before pad: fewer bytes moved
        pr, pc = rows - a.shape[0], cols - a.shape[1]
        if pr or pc:
            a = jnp.pad(a, ((0, pr), (0, pc)))
        return a

    # TODO(synk): if w/b are static model parameters, pre-cast/pre-pad them once
    # outside this call instead of per-forward.
    x_p = cast_pad(x, b_pad, in_pad)
    w_p = cast_pad(w, in_pad, out_pad)
    bias_p = b.astype(jnp.float32)
    if out_pad != OUT:
        bias_p = jnp.pad(bias_p, (0, out_pad - OUT))
    bias_p = bias_p.reshape(1, out_pad)

    grid = (b_pad // tm, out_pad // tn, in_pad // tk)

    keep_threshold = min(int(dropout_p * 4294967296.0), 4294967295)
    scale = 1.0 / (1.0 - dropout_p)
    # bf16 operands -> native MXU rate; if the caller insists on f32, pin the
    # numerics/speed explicitly instead of inheriting the compiler default.
    precision = (jax.lax.Precision.HIGHEST
                 if compute_dtype == jnp.dtype(jnp.float32) else None)

    kernel = functools.partial(
        _linear_relu_dropout_kernel,
        k_steps=grid[2], n_cols=out_pad,
        keep_threshold=keep_threshold, scale=scale,
        apply_dropout=dropout_p > 0.0, precision=precision)

    # Double-buffered x/w/bias/out tiles + f32 accumulator, plus headroom.
    in_it = compute_dtype.itemsize
    out_it = jnp.dtype(x.dtype).itemsize
    vmem_bytes = (2 * tm * tk * in_it + 2 * tk * tn * in_it + 2 * tn * 4
                  + 2 * tm * tn * out_it + tm * tn * 4)
    vmem_limit = min(max(vmem_bytes + (8 << 20), 32 << 20), 64 << 20)

    out_p = pl.pallas_call(
        kernel,
        out_shape=jax.ShapeDtypeStruct((b_pad, out_pad), x.dtype),
        grid_spec=pltpu.PrefetchScalarGridSpec(
            num_scalar_prefetch=1,                  # seed -> SMEM
            grid=grid,
            in_specs=[
                pl.BlockSpec((tm, tk), lambda i, j, k, s: (i, k)),   # x tile
                pl.BlockSpec((tk, tn), lambda i, j, k, s: (k, j)),   # w tile
                pl.BlockSpec((1, tn), lambda i, j, k, s: (0, j)),    # bias tile
            ],
            out_specs=pl.BlockSpec((tm, tn), lambda i, j, k, s: (i, j)),
            scratch_shapes=[pltpu.VMEM((tm, tn), jnp.float32)],
        ),
        compiler_params=pltpu.CompilerParams(
            # M/N tiles shard across TensorCores (v7x megacore); K is reduction.
            dimension_semantics=("parallel", "parallel", "arbitrary"),
            vmem_limit_bytes=vmem_limit,
        ),
    )(seed, x_p, w_p, bias_p)

    if b_pad == B and out_pad == OUT:
        return out_p
    return out_p[:B, :OUT]


if __name__ == "__main__":
    key = jax.random.PRNGKey(0)
    kx, kw, kb = jax.random.split(key, 3)

    B, IN, OUT = 8, 32, 32                    # small demo shapes (padded to 128 lanes)
    x = jax.random.normal(kx, (B, IN), dtype=jnp.float32)
    w = jax.random.normal(kw, (IN, OUT), dtype=jnp.float32) * 0.1
    b = jax.random.normal(kb, (OUT,), dtype=jnp.float32) * 0.1
    seed = jnp.array([1234], dtype=jnp.int32)

    out = activation_dropout_wrapper(x, w, b, seed)
    jax.block_until_ready(out)

    # Surviving elements must equal relu(x@w+b) / (1-p) (reference uses the same
    # bf16 operand cast the kernel feeds the MXU); dropped ones are 0.
    xb = x.astype(jnp.bfloat16).astype(jnp.float32)
    wb = w.astype(jnp.bfloat16).astype(jnp.float32)
    ref = jnp.maximum(xb @ wb + b, 0.0) / (1.0 - DROPOUT_P)
    kept = out != 0.0
    ok = jnp.where(kept, jnp.abs(out - ref) <= 5e-3 * (1.0 + jnp.abs(ref)), True)
    assert bool(jnp.all(ok))
    # Dropped fraction among strictly-positive activations should be ~p.
    pos = ref > 1e-5
    drop_frac = jnp.sum(pos & ~kept) / jnp.maximum(jnp.sum(pos), 1)
    assert 0.05 < float(drop_frac) < 0.95
    assert out.shape == (B, OUT)

    print("KERNEL_OK")
</pallas_src>

<mosaic_0001>
module attributes {stable_mosaic.version = 11 : i64} {
  func.func @_linear_relu_dropout_kernel(%arg0: i32, %arg1: i32, %arg2: i32, %arg3: memref<1xi32, #tpu.memory_space<smem>>, %arg4: memref<16x128xbf16, #tpu.memory_space<vmem>>, %arg5: memref<128x128xbf16, #tpu.memory_space<vmem>>, %arg6: memref<1x128xf32, #tpu.memory_space<vmem>>, %arg7: memref<16x128xf32, #tpu.memory_space<vmem>>, %arg8: memref<16x128xf32, #tpu.memory_space<vmem>>) attributes {dimension_semantics = [#tpu.dimension_semantics<parallel>, #tpu.dimension_semantics<parallel>, #tpu.dimension_semantics<arbitrary>], iteration_bounds = array<i64: 1, 1, 1>, scalar_prefetch = 1 : i64, scratch_operands = 1 : i64, tpu.core_type = #tpu.core_type<tc>, window_params = [{transform_indices = @transform_0, window_bounds = array<i64: 16, 128>}, {transform_indices = @transform_1, window_bounds = array<i64: 128, 128>}, {transform_indices = @transform_2, window_bounds = array<i64: 1, 128>}, {transform_indices = @transform_3, window_bounds = array<i64: 16, 128>}]} {
    %c0_i32 = arith.constant 0 : i32
    %0 = arith.cmpi eq, %arg2, %c0_i32 : i32
    %1 = arith.extui %0 : i1 to i32
    %c0_i32_0 = arith.constant 0 : i32
    %2 = arith.cmpi ne, %1, %c0_i32_0 : i32
    scf.if %2 {
      %cst_10 = arith.constant 0.000000e+00 : f32
      %12 = vector.broadcast %cst_10 : f32 to vector<16x128xf32>
      %c0_11 = arith.constant 0 : index
      %c0_12 = arith.constant 0 : index
      %13 = vector.load %arg8[%c0_11, %c0_12] : memref<16x128xf32, #tpu.memory_space<vmem>>, vector<16x128xf32>
      tpu.vector_store %arg8[%c0_11, %c0_12], %12 {strides = array<i32>} : memref<16x128xf32, #tpu.memory_space<vmem>>, vector<16x128xf32>,
    } else {
    }
    %c0 = arith.constant 0 : index
    %c0_1 = arith.constant 0 : index
    %3 = vector.load %arg8[%c0, %c0_1] : memref<16x128xf32, #tpu.memory_space<vmem>>, vector<16x128xf32>
    %c0_2 = arith.constant 0 : index
    %c0_3 = arith.constant 0 : index
    %4 = vector.load %arg4[%c0_2, %c0_3] : memref<16x128xbf16, #tpu.memory_space<vmem>>, vector<16x128xbf16>
    %c0_4 = arith.constant 0 : index
    %c0_5 = arith.constant 0 : index
    %5 = vector.load %arg5[%c0_4, %c0_5] : memref<128x128xbf16, #tpu.memory_space<vmem>>, vector<128x128xbf16>
    %cst = arith.constant dense<0.000000e+00> : vector<16x128xf32>
    %6 = tpu.matmul %4, %5, %cst {dimension_numbers = #tpu.dot_dimension_numbers<[1], [0], [0], [1], [0, 0, 1, 1], [], []>} : vector<16x128xbf16>, vector<128x128xbf16>, vector<16x128xf32> -> vector<16x128xf32>
    %7 = arith.addf %3, %6 : vector<16x128xf32>
    %c0_6 = arith.constant 0 : index
    %c0_7 = arith.constant 0 : index
    %8 = vector.load %arg8[%c0_6, %c0_7] : memref<16x128xf32, #tpu.memory_space<vmem>>, vector<16x128xf32>
    tpu.vector_store %arg8[%c0_6, %c0_7], %7 {strides = array<i32>} : memref<16x128xf32, #tpu.memory_space<vmem>>, vector<16x128xf32>,
    %c0_i32_8 = arith.constant 0 : i32
    %9 = arith.cmpi eq, %arg2, %c0_i32_8 : i32
    %10 = arith.extui %9 : i1 to i32
    %c0_i32_9 = arith.constant 0 : i32
    %11 = arith.cmpi ne, %10, %c0_i32_9 : i32
    scf.if %11 {
      %c0_10 = arith.constant 0 : index
      %c0_11 = arith.constant 0 : index
      %12 = vector.load %arg8[%c0_10, %c0_11] : memref<16x128xf32, #tpu.memory_space<vmem>>, vector<16x128xf32>
      %c0_12 = arith.constant 0 : index
      %c0_13 = arith.constant 0 : index
      %13 = vector.load %arg6[%c0_12, %c0_13] : memref<1x128xf32, #tpu.memory_space<vmem>>, vector<1x128xf32>
      %14 = vector.broadcast %13 : vector<1x128xf32> to vector<16x128xf32>
      %15 = arith.addf %12, %14 : vector<16x128xf32>
      %cst_14 = arith.constant 0.000000e+00 : f32
      %16 = vector.broadcast %cst_14 : f32 to vector<16x128xf32>
      %17 = arith.maximumf %15, %16 : vector<16x128xf32>
      %c0_15 = arith.constant 0 : index
      %18 = memref.load %arg3[%c0_15] : memref<1xi32, #tpu.memory_space<smem>>
      %19 = tpu.iota {dimensions = array<i32: 0>} : vector<16x1xi32>
      %c16_i32 = arith.constant 16 : i32
      %20 = arith.muli %arg0, %c16_i32 : i32
      %21 = vector.broadcast %20 : i32 to vector<16x1xi32>
      %22 = arith.addi %19, %21 : vector<16x1xi32>
      %c128_i32 = arith.constant 128 : i32
      %23 = vector.broadcast %c128_i32 : i32 to vector<16x1xi32>
      %24 = arith.muli %22, %23 : vector<16x1xi32>
      %c-1640531527_i32 = arith.constant -1640531527 : i32
      %25 = arith.muli %18, %c-1640531527_i32 : i32
      %26 = vector.broadcast %25 : i32 to vector<16x1xi32>
      %27 = arith.addi %24, %26 : vector<16x1xi32>
      %28 = tpu.iota {dimensions = array<i32: 1>} : vector<1x128xi32>
      %c128_i32_16 = arith.constant 128 : i32
      %29 = arith.muli %arg1, %c128_i32_16 : i32
      %30 = vector.broadcast %29 : i32 to vector<1x128xi32>
      %31 = arith.addi %28, %30 : vector<1x128xi32>
      %32 = vector.broadcast %27 : vector<16x1xi32> to vector<16x128xi32>
      %33 = vector.broadcast %31 : vector<1x128xi32> to vector<16x128xi32>
      %34 = arith.addi %32, %33 : vector<16x128xi32>
      %c16_i32_17 = arith.constant 16 : i32
      %35 = vector.broadcast %c16_i32_17 : i32 to vector<16x128xi32>
      %36 = arith.shrui %34, %35 : vector<16x128xi32>
      %37 = arith.xori %34, %36 : vector<16x128xi32>
      %c2146121005_i32 = arith.constant 2146121005 : i32
      %38 = vector.broadcast %c2146121005_i32 : i32 to vector<16x128xi32>
      %39 = arith.muli %37, %38 : vector<16x128xi32>
      %c15_i32 = arith.constant 15 : i32
      %40 = vector.broadcast %c15_i32 : i32 to vector<16x128xi32>
      %41 = arith.shrui %39, %40 : vector<16x128xi32>
      %42 = arith.xori %39, %41 : vector<16x128xi32>
      %c-2073254261_i32 = arith.constant -2073254261 : i32
      %43 = vector.broadcast %c-2073254261_i32 : i32 to vector<16x128xi32>
      %44 = arith.muli %42, %43 : vector<16x128xi32>
      %c16_i32_18 = arith.constant 16 : i32
      %45 = vector.broadcast %c16_i32_18 : i32 to vector<16x128xi32>
      %46 = arith.shrui %44, %45 : vector<16x128xi32>
      %47 = arith.xori %44, %46 : vector<16x128xi32>
      %c-2147483648_i32 = arith.constant -2147483648 : i32
      %48 = vector.broadcast %c-2147483648_i32 : i32 to vector<16x128xi32>
      %49 = arith.cmpi uge, %47, %48 : vector<16x128xi32>
      %cst_19 = arith.constant 2.000000e+00 : f32
      %50 = vector.broadcast %cst_19 : f32 to vector<16x128xf32>
      %51 = arith.mulf %17, %50 : vector<16x128xf32>
      %cst_20 = arith.constant 0.000000e+00 : f32
      %52 = vector.broadcast %cst_20 : f32 to vector<16x128xf32>
      %53 = arith.select %49, %51, %52 : vector<16x128xi1>, vector<16x128xf32>
      %c0_21 = arith.constant 0 : index
      %c0_22 = arith.constant 0 : index
      %54 = vector.load %arg7[%c0_21, %c0_22] : memref<16x128xf32, #tpu.memory_space<vmem>>, vector<16x128xf32>
      tpu.vector_store %arg7[%c0_21, %c0_22], %53 {strides = array<i32>} : memref<16x128xf32, #tpu.memory_space<vmem>>, vector<16x128xf32>,
    } else {
    }
    return
  }
  func.func @transform_0(%arg0: i32, %arg1: i32, %arg2: i32, %arg3: memref<1xi32, #tpu.memory_space<smem>>) -> (i32, i32) {
    %c0_i32 = arith.constant 0 : i32
    return %arg0, %arg2 : i32, i32
  }
  func.func @transform_1(%arg0: i32, %arg1: i32, %arg2: i32, %arg3: memref<1xi32, #tpu.memory_space<smem>>) -> (i32, i32) {
    %c0_i32 = arith.constant 0 : i32
    return %arg2, %arg1 : i32, i32
  }
  func.func @transform_2(%arg0: i32, %arg1: i32, %arg2: i32, %arg3: memref<1xi32, #tpu.memory_space<smem>>) -> (i32, i32) {
    %c0_i32 = arith.constant 0 : i32
    %c0_i32_0 = arith.constant 0 : i32
    return %c0_i32, %arg1 : i32, i32
  }
  func.func @transform_3(%arg0: i32, %arg1: i32, %arg2: i32, %arg3: memref<1xi32, #tpu.memory_space<smem>>) -> (i32, i32) {
    %c0_i32 = arith.constant 0 : i32
    return %arg0, %arg1 : i32, i32
  }
}

</mosaic_0001>

<llo_original>
// kernel: tpu_custom_call.1
$region0: #{tpu_custom_call.1}
  #allocation0 [shape = 'u32[]', space=smem, size = 0x4, offset = 0x4, fixed_abs, tag = 'smem constant byte address 0x4 - core index']
  #allocation1 [shape = 'u32[144,128]{1,0:T(1,128)}', space=vmem, size = 0x12000, scoped, tag = 'internal scratch']
  #allocation2 [shape = 'f32[16,128]{1,0:T(8,128)}', space=vmem, size = 0x2000, scoped, tag = 'scratch operand']
  #allocation3 [shape = 's32[1]{0}', space=sflag, size = 0x4, scoped, tag = 'scoped memory for tpu_custom_call.1']
  #allocation4 [shape = 's32[1]{0:T(128)S(6)}', space=smem, size = 0x200, scoped, tag = 'prefetched SMEM operand 0']
  %s0 = inlined_call_operand.<no memory space> [shape: s32[1], index: 0, kind: input, shape index: {}]
  %s1 = inlined_call_operand.hbm [shape: bf16[16,128], index: 1, kind: input, shape index: {}]
  %s2 = inlined_call_operand.hbm [shape: bf16[128,128], index: 2, kind: input, shape index: {}]
  %s3 = inlined_call_operand.vmem [shape: f32[1,128], index: 3, kind: input, shape index: {}]
  %s4 = inlined_call_operand.hbm [shape: f32[16,128], index: 4, kind: output, shape index: {}]
  %s5 = sld [smem:[#allocation0]]
  $region38: #{tpu_custom_call.1} parent=0
    _
  %s7 = ssub.s32 1, %s5
  %s8 = scalar_select 0, %s7, %s5
  %9 = sst [smem:[#allocation4]] %s0
  $region1: #{tpu_custom_call.1} parent=0
    #allocation5 [shape = 'u8[4096]{0}', space=vmem, size = 0x1000, scoped, tag = 'input window, operand 1, single buffered']
    #allocation6 [shape = 's32[1]{0}', space=sflag, size = 0x4, scoped, tag = 'scoped memory for tpu_custom_call.1']
    #allocation7 [shape = 's32[1]{0}', space=sflag, size = 0x4, scoped, tag = 'scoped memory for tpu_custom_call.1']
    #allocation8 [shape = 'u8[32768]{0}', space=vmem, size = 0x8000, scoped, tag = 'input window, operand 2, single buffered']
    #allocation9 [shape = 's32[1]{0}', space=sflag, size = 0x4, scoped, tag = 'scoped memory for tpu_custom_call.1']
    #allocation10 [shape = 'u8[8192]{0}', space=vmem, size = 0x2000, scoped, tag = 'output window, operand 0, single buffered']
    %10 = vsyncpa [#allocation6], 0
    %11 = vsyncpa [#allocation9], 0
    %12 = vsyncpa [#allocation7], 0
    // Predicated region
    $region2: #{tpu_custom_call.1} parent=1 // pred_check
      _
    $region3: #{tpu_custom_call.1} parent=1 // pred_check_branch
      %14 = sbr.rel (0) target = $region5
    $region4: #{tpu_custom_call.1} parent=1 // pred_region
      %s16 = ssub.s32 128, 128
      %17 = vsyncadd [#allocation6], %s16
      %s18 = sshll.u32 [#allocation5], 4
      %s19 = int_to_ptr.vmem [resolvable:$true] %s18
      %24 = dma.hbm_to_vmem [thread:$0]  %s1, 128, %s19, [#allocation6], 64, 64, 4
    $region5: #{tpu_custom_call.1} parent=1 // pred_fallthru
      _
    // Predicated region
    $region6: #{tpu_custom_call.1} parent=1 // pred_check
      _
    $region7: #{tpu_custom_call.1} parent=1 // pred_check_branch
      %26 = sbr.rel (0) target = $region9
    $region8: #{tpu_custom_call.1} parent=1 // pred_region
      %s28 = ssub.s32 1024, 1024
      %29 = vsyncadd [#allocation9], %s28
      %s30 = sshll.u32 [#allocation8], 4
      %s31 = int_to_ptr.vmem [resolvable:$true] %s30
      %36 = dma.hbm_to_vmem [thread:$0]  %s2, 1024, %s31, [#allocation9], 64, 64, 4
    $region9: #{tpu_custom_call.1} parent=1 // pred_fallthru
      _
    // Predicated region
    $region10: #{tpu_custom_call.1} parent=1 // pred_check
      _
    $region11: #{tpu_custom_call.1} parent=1 // pred_check_branch
      %38 = sbr.rel (0) target = $region13
    $region12: #{tpu_custom_call.1} parent=1 // pred_region
      _
    $region13: #{tpu_custom_call.1} parent=1 // pred_fallthru
      _
    // Predicated region
    $region14: #{tpu_custom_call.1} parent=1 // pred_check
      _
    $region15: #{tpu_custom_call.1} parent=1 // pred_check_branch
      %40 = sbr.rel (0) target = $region17
    $region16: #{tpu_custom_call.1} parent=1 // pred_region
      %41 = dma.done [#allocation6], 128
    $region17: #{tpu_custom_call.1} parent=1 // pred_fallthru
      _
    // Predicated region
    $region18: #{tpu_custom_call.1} parent=1 // pred_check
      _
    $region19: #{tpu_custom_call.1} parent=1 // pred_check_branch
      %43 = sbr.rel (0) target = $region21
    $region20: #{tpu_custom_call.1} parent=1 // pred_region
      %44 = dma.done [#allocation9], 1024
    $region21: #{tpu_custom_call.1} parent=1 // pred_fallthru
      _
    %p46 = scmp.eq.s32.totalorder 0, 0
    // Predicated region
    $region22: #{tpu_custom_call.1} parent=1 // pred_check
      %p47 = pneg %p46
    $region23: #{tpu_custom_call.1} parent=1 // pred_check_branch
      %49 = sbr.rel (%p47) target = $region25
    $region24: #{tpu_custom_call.1} parent=1 // pred_region
      %50 = vst [vmem:[#allocation2] sm:$0xff] 0.0
      %51 = vst [vmem:[#allocation2 + $0x8] sm:$0xff] 0.0
    $region25: #{tpu_custom_call.1} parent=1 // pred_fallthru
      _
    %v52 = vld [vmem:[#allocation2] sm:$0xff]
    %v53 = vld [vmem:[#allocation2 + $0x8] sm:$0xff]
    %v54 = vld [vmem:[#allocation5] sm:$0xf]
    %v55 = vld [vmem:[#allocation5 + $0x4] sm:$0xf]
    %v56 = vld [vmem:[#allocation8] sm:$0xf]
    %v57 = vld [vmem:[#allocation8 + $0x4] sm:$0xf]
    %v58 = vld [vmem:[#allocation8 + $0x8] sm:$0xf]
    %v59 = vld [vmem:[#allocation8 + $0xc] sm:$0xf]
    %v60 = vld [vmem:[#allocation8 + $0x10] sm:$0xf]
    %v61 = vld [vmem:[#allocation8 + $0x14] sm:$0xf]
    %v62 = vld [vmem:[#allocation8 + $0x18] sm:$0xf]
    %v63 = vld [vmem:[#allocation8 + $0x1c] sm:$0xf]
    %v64 = vld [vmem:[#allocation8 + $0x20] sm:$0xf]
    %v65 = vld [vmem:[#allocation8 + $0x24] sm:$0xf]
    %v66 = vld [vmem:[#allocation8 + $0x28] sm:$0xf]
    %v67 = vld [vmem:[#allocation8 + $0x2c] sm:$0xf]
    %v68 = vld [vmem:[#allocation8 + $0x30] sm:$0xf]
    %v69 = vld [vmem:[#allocation8 + $0x34] sm:$0xf]
    %v70 = vld [vmem:[#allocation8 + $0x38] sm:$0xf]
    %v71 = vld [vmem:[#allocation8 + $0x3c] sm:$0xf]
    %v74 = vunpack.c.l.b16 %v54
    %v75 = vunpack.c.l.b16 %v55
    %v76 = vpack.c.b16 %v75, %v74
    %v94 = vunpack.c.l.b16 %v56
    %v95 = vunpack.c.l.b16 %v57
    %v96 = vunpack.c.l.b16 %v58
    %v97 = vunpack.c.l.b16 %v59
    %v98 = vunpack.c.l.b16 %v60
    %v99 = vunpack.c.l.b16 %v61
    %v100 = vunpack.c.l.b16 %v62
    %v101 = vunpack.c.l.b16 %v63
    %v102 = vunpack.c.l.b16 %v64
    %v103 = vunpack.c.l.b16 %v65
    %v104 = vunpack.c.l.b16 %v66
    %v105 = vunpack.c.l.b16 %v67
    %v106 = vunpack.c.l.b16 %v68
    %v107 = vunpack.c.l.b16 %v69
    %v108 = vunpack.c.l.b16 %v70
    %v109 = vunpack.c.l.b16 %v71
    %v110 = vpack.c.b16 %v95, %v94
    %v111 = vpack.c.b16 %v97, %v96
    %v112 = vpack.c.b16 %v99, %v98
    %v113 = vpack.c.b16 %v101, %v100
    %v114 = vpack.c.b16 %v103, %v102
    %v115 = vpack.c.b16 %v105, %v104
    %v116 = vpack.c.b16 %v107, %v106
    %v117 = vpack.c.b16 %v109, %v108
    %126 = vmatprep.subr.bf16.mxu0 0
    %127 = vmatpush1.bf16.msra.mxu0 %v117
    %128 = vmatprep.subr.bf16.mxu0 0
    %129 = vmatpush1.bf16.msra.mxu0 %v116
    %130 = vmatprep.subr.bf16.mxu0 0
    %131 = vmatpush1.bf16.msra.mxu0 %v115
    %132 = vmatprep.subr.bf16.mxu0 0
    %133 = vmatpush1.bf16.msra.mxu0 %v114
    %134 = vmatprep.subr.bf16.mxu0 0
    %135 = vmatpush1.bf16.msra.mxu0 %v113
    %136 = vmatprep.subr.bf16.mxu0 0
    %137 = vmatpush1.bf16.msra.mxu0 %v112
    %138 = vmatprep.subr.bf16.mxu0 0
    %139 = vmatpush1.bf16.msra.mxu0 %v111
    %140 = vmatprep.subr.bf16.mxu0 0
    %141 = vmatpush1.bf16.msra.mxu0 %v110
    %142 = vmatprep.subr.bf16.mxu0 0
    %143 = vmatpush2.bf16.msra.mxu0 0
    %144 = vmatprep.subr.bf16.mxu0 0
    %145 = vmatpush2.bf16.msra.mxu0 0
    %146 = vmatprep.subr.bf16.mxu0 0
    %147 = vmatpush2.bf16.msra.mxu0 0
    %148 = vmatprep.subr.bf16.mxu0 0
    %149 = vmatpush2.bf16.msra.mxu0 0
    %150 = vmatprep.subr.bf16.mxu0 0
    %151 = vmatpush2.bf16.msra.mxu0 0
    %152 = vmatprep.subr.bf16.mxu0 0
    %153 = vmatpush2.bf16.msra.mxu0 0
    %154 = vmatprep.subr.bf16.mxu0 0
    %155 = vmatpush2.bf16.msra.mxu0 0
    %156 = vmatprep.subr.bf16.mxu0 0
    %157 = vmatpush2.bf16.msra.mxu0 0
    %158 = vmatprep.mubr.bf16.mxu0 0
    %159 = vmatmul.mubr.bf16.gmra.mxu0 %v76
    %v160 = vpop.f32.mrf.mxu0
    %v161 = vadd.f32 0.0, %v160
    %v162 = vpop.f32.mrf.mxu0
    %v163 = vpop.f32.mrf.mxu0
    %v164 = vadd.f32 0.0, %v163
    %v165 = vpop.f32.mrf.mxu0
    %166 = vdwg.mxu0
    %v167 = vadd.f32 %v52, %v161
    %v168 = vadd.f32 %v53, %v164
    %169 = vst [vmem:[#allocation2] sm:$0xff] %v167
    %170 = vst [vmem:[#allocation2 + $0x8] sm:$0xff] %v168
    // Predicated region
    $region26: #{tpu_custom_call.1} parent=1 // pred_check
      %p171 = pneg %p46
    $region27: #{tpu_custom_call.1} parent=1 // pred_check_branch
      %173 = sbr.rel (%p171) target = $region29
    $region28: #{tpu_custom_call.1} parent=1 // pred_region
      %v174 = vld [vmem:[#allocation2] sm:$0xff]
      %v175 = vld [vmem:[#allocation2 + $0x8] sm:$0xff]
      %v176 = vld [vmem:[%s3] sm:$0x1]
      %v178 = vlaneseq
      %v179 = vshrl.u32 %v178, 7
      %v180 = vsub.s32 0, %v179
      %v181 = vrot.slane %v176, %v180
      %v183 = vadd.f32 %v174, %v181
      %v184 = vadd.f32 %v175, %v181
      %v185 = vmax.f32 %v183, 0.0
      %v186 = vmax.f32 %v184, 0.0
      %s187 = sld [smem:[#allocation4]]
      %v188 = vlaneseq
      %v189 = vshrl.u32 %v188, 7
      %v190 = vadd.s32 %v189, 8
      %s191 = smul.u32 0, 16
      %v192 = vstv %s191
      %v193 = vadd.s32 %v189, %v192
      %v194 = vadd.s32 %v190, %v192
      %v195 = vmul.u32 %v193, 128
      %v196 = vmul.u32 %v194, 128
      %s197 = smul.u32 %s187, 2654435769
      %v198 = vstv %s197
      %v199 = vadd.s32 %v195, %v198
      %v200 = vadd.s32 %v196, %v198
      %v201 = vlaneseq
      %v202 = vand.u32 %v201, 127
      %s203 = smul.u32 0, 128
      %v204 = vstv %s203
      %v205 = vadd.s32 %v202, %v204
      %v206 = vadd.s32 %v199, %v205
      %v207 = vadd.s32 %v200, %v205
      %v208 = vshrl.u32 %v206, 16
      %v209 = vshrl.u32 %v207, 16
      %v210 = vxor.u32 %v206, %v208
      %v211 = vxor.u32 %v207, %v209
      %v212 = vmul.u32 %v210, 2146121005
      %v213 = vmul.u32 %v211, 2146121005
      %v214 = vshrl.u32 %v212, 15
      %v215 = vshrl.u32 %v213, 15
      %v216 = vxor.u32 %v212, %v214
      %v217 = vxor.u32 %v213, %v215
      %v218 = vmul.u32 %v216, 2221713035
      %v219 = vmul.u32 %v217, 2221713035
      %v220 = vshrl.u32 %v218, 16
      %v221 = vshrl.u32 %v219, 16
      %v222 = vxor.u32 %v218, %v220
      %v223 = vxor.u32 %v219, %v221
      %vm224 = vcmp.ge.u32.totalorder %v222, 2147483648
      %vm225 = vcmp.ge.u32.totalorder %v223, 2147483648
      %v226 = vmul.f32 %v185, 2.0
      %v227 = vmul.f32 %v186, 2.0
      %v228 = vsel %vm224, %v226, 0.0
      %v229 = vsel %vm225, %v227, 0.0
      %230 = vst [vmem:[#allocation10] sm:$0xff] %v228
      %231 = vst [vmem:[#allocation10 + $0x8] sm:$0xff] %v229
    $region29: #{tpu_custom_call.1} parent=1 // pred_fallthru
      _
    // Predicated region
    $region30: #{tpu_custom_call.1} parent=1 // pred_check
      _
    $region31: #{tpu_custom_call.1} parent=1 // pred_check_branch
      %233 = sbr.rel (0) target = $region33
    $region32: #{tpu_custom_call.1} parent=1 // pred_region
      %s235 = ssub.s32 256, 256
      %236 = vsyncadd [#allocation7], %s235
      %s237 = sshll.u32 [#allocation10], 4
      %s238 = int_to_ptr.vmem [resolvable:$true] %s237
      %243 = dma.vmem_to_hbm [thread:$0]  %s238, 256, %s4, [#allocation7], 128, 128, 8
    $region33: #{tpu_custom_call.1} parent=1 // pred_fallthru
      _
    // Predicated region
    $region34: #{tpu_custom_call.1} parent=1 // pred_check
      _
    $region35: #{tpu_custom_call.1} parent=1 // pred_check_branch
      %245 = sbr.rel (0) target = $region37
    $region36: #{tpu_custom_call.1} parent=1 // pred_region
      %246 = dma.done [#allocation7], 256
    $region37: #{tpu_custom_call.1} parent=1 // pred_fallthru
      _
    %247 = vsyncpa [#allocation6], 1
    %248 = vsyncpa [#allocation9], 1
    %249 = vsyncpa [#allocation7], 1

</llo_original>
